<compile_context>
chip_gen: v7x
topology: tpu7x:2x2x1
jax: 0.10.0
libtpu: 0.0.40
codegen_flags: <defaults>
</compile_context>

<pallas_src>
import functools

import jax
import jax.numpy as jnp
from jax.experimental import pallas as pl
from jax.experimental.pallas import tpu as pltpu


# ----------------------------------------------------------------------------
# Small helpers
# ----------------------------------------------------------------------------
def _buffered_one_supported():
    # Probe whether BlockSpec accepts pipeline_mode=pl.Buffered(1) on this jax.
    try:
        pl.BlockSpec((8, 128), lambda i: (0, 0), pipeline_mode=pl.Buffered(1))
        return True
    except Exception:
        return False


_SINGLE_BUFFER_CONSTS = _buffered_one_supported()


def _const_spec(a):
    """VMEM-resident constant operand (weights/biases): constant index_map, and
    single-buffered when supported (halves resident VMEM under v7x's 64 MiB)."""
    if _SINGLE_BUFFER_CONSTS:
        return pl.BlockSpec(a.shape, lambda i: (0, 0), pipeline_mode=pl.Buffered(1))
    return pl.BlockSpec(a.shape, lambda i: (0, 0))


def _reciprocal(x):
    # EUP approximate reciprocal + one Newton-Raphson step: the divide stays in
    # the otherwise-idle EUP slot, accuracy back to ~f32 (meets 1e-4 tolerance).
    r = pl.reciprocal(x, approx=True)
    return r * (2.0 - x * r)


# ----------------------------------------------------------------------------
# In-kernel paired softmax (class-major layout, streamed into the output ref)
# ----------------------------------------------------------------------------
def _paired_softmax_cm_store(g_cm, mask_cm_ref, out_ref, col0, user_num, class_num):
    """Exact per-group softmax in class-major layout, written straight to out_ref.

    g_cm: (rows, class_num*user_num); column c*U + u holds the class-c logit of
    group/user u.  Group members sit at the same position of the C slabs, so
    max / sum / normalize are pure element-wise ops (VPU/EUP) with the exact
    per-group max (no exp-underflow -> NaN failure mode).  Normalized slabs are
    stored directly into out_ref[:, col0 + c*U : col0 + (c+1)*U] (no concatenate
    copy; at most ~2 slabs live at any time).
    """
    U, C = user_num, class_num
    # pass 1: exact per-group max
    m = g_cm[:, 0:U]
    for c in range(1, C):
        m = jnp.maximum(m, g_cm[:, c * U:(c + 1) * U])
    # pass 2: exp -> store unnormalized, accumulate denominator
    denom = None
    for c in range(C):
        e = jnp.exp(g_cm[:, c * U:(c + 1) * U] - m)
        out_ref[:, col0 + c * U:col0 + (c + 1) * U] = e.astype(out_ref.dtype)
        denom = e if denom is None else denom + e
    inv = _reciprocal(denom)                       # (rows, U): C x fewer recips
    # pass 3: normalize in place (+ optional mask), one slab live at a time
    for c in range(C):
        sl = slice(col0 + c * U, col0 + (c + 1) * U)
        v = out_ref[:, sl] * inv
        if mask_cm_ref is not None:
            v = v * mask_cm_ref[:, c * U:(c + 1) * U]
        out_ref[:, sl] = v.astype(out_ref.dtype)
    # TODO(synk): for very large user_num, pad U up to a multiple of 128 (logit
    # pad = large negative) so each slab slice is lane-tile aligned.


# ----------------------------------------------------------------------------
# mode == 'decoder'  (class `decoder` + mask multiply) -- gridded over batch
# ----------------------------------------------------------------------------
def _decoder_kernel(x_ref, mask_cm_ref, we_ref, be_ref, wd_cm_ref, bd_cm_ref,
                    out_ref, *, user_num, class_num, latent_dim):
    # NOTE: rows of a padded partial batch tile hold undefined data; every op
    # here is strictly row-wise, so garbage rows never contaminate valid rows
    # and are dropped by the clipped output writeback.  Do not add cross-row
    # reductions here without masking.
    x = x_ref[...]                                                   # (TB, R)
    side = jax.nn.sigmoid(
        jnp.dot(x, we_ref[...], preferred_element_type=jnp.float32) + be_ref[...])
    out_ref[:, 0:latent_dim] = side.astype(out_ref.dtype)           # (TB, L)

    # wd/bd arrive column-permuted to class-major (wrapper gather), so g is
    # already class-major -- no permutation matmul needed.
    g_cm = (jnp.dot(side, wd_cm_ref[...], preferred_element_type=jnp.float32)
            + bd_cm_ref[...])                                        # (TB, UC)
    _paired_softmax_cm_store(g_cm, mask_cm_ref, out_ref, latent_dim,
                             user_num, class_num)


# ----------------------------------------------------------------------------
# mode == 'encoder'  (class `Sideencoder`)
#   kernel 1: per-batch y_hat (gridded)
#   kernel 2: batch-invariant x_hat rows (grid-less, hoisted out of the batch)
# ----------------------------------------------------------------------------
def _yhat_kernel(x_ref, we_ref, be_ref, y_ref):
    logits = (jnp.dot(x_ref[...], we_ref[...], preferred_element_type=jnp.float32)
              + be_ref[...])                                         # (TB, C)
    m = jnp.max(logits, axis=-1, keepdims=True)
    e = jnp.exp(logits - m)
    s = jnp.sum(e, axis=-1, keepdims=True)
    y_ref[...] = (e * _reciprocal(s)).astype(y_ref.dtype)
    # TODO(synk): last dim == class_num may be <128 -> masked partial stores;
    # pad the output width to 128 and slice in the wrapper if this ever matters.


def _xhat_kernel(wd_cm_ref, bd_cm_ref, xhat_ref, *, user_num, class_num,
                 latent_dim):
    # decoder(one_hot(i)) == ed_wd[i, :] + ed_bd, independent of the batch.
    x_all = wd_cm_ref[...] + bd_cm_ref[...]                          # (C, d_in)
    if latent_dim > 0:
        xhat_ref[:, 0:latent_dim] = jax.nn.sigmoid(
            x_all[:, 0:latent_dim]).astype(xhat_ref.dtype)
    _paired_softmax_cm_store(x_all[:, latent_dim:], None, xhat_ref, latent_dim,
                             user_num, class_num)
    # TODO(synk): paired_softmax's binary=True branch (argmax + xor one-hot) is
    # never reached by Extractor.forward, so it is not implemented here.


# ----------------------------------------------------------------------------
# Host-side glue
# ----------------------------------------------------------------------------
def _pick_batch_tile(batch, stream_row_bytes, resident_bytes):
    """Largest batch tile such that resident weights plus double-buffered
    streamed rows stay inside a cross-generation VMEM budget (sized against
    v7x's 64 MiB physical VMEM), while keeping >=2 grid steps for the v7x
    megacore when the batch is large enough."""
    if batch <= 8:
        return batch                          # full dim: no (8,) constraint
    budget = 40 * 1024 * 1024                 # headroom under the 48 MiB limit
    resident = resident_bytes * (1 if _SINGLE_BUFFER_CONSTS else 2)
    avail = max(budget - resident, 2 * 1024 * 1024)
    tile = avail // max(2 * stream_row_bytes, 1)     # 2x: double-buffered rows
    half = max(8, (((batch + 1) // 2) // 8) * 8)     # >=2 grid steps (megacore)
    tile = min(tile, half, 8192, batch)
    return max(8, (tile // 8) * 8)


def _vmem_limit_bytes(resident_bytes, stream_row_bytes, tb):
    resident = resident_bytes * (1 if _SINGLE_BUFFER_CONSTS else 2)
    need = resident + 2 * tb * stream_row_bytes + (8 << 20)  # + scratch headroom
    return int(min(max(need, 32 << 20), 48 << 20))           # <= v7x 64MiB phys


def init_params(key, record_num, user_num, class_num, latent_dim, side_signal=True):
    """PyTorch-Linear-style init (uniform +-1/sqrt(fan_in)).
    Weights stored (in_features, out_features); biases (1, out_features)."""
    uc = user_num * class_num
    d_in = latent_dim + uc if side_signal else uc
    ks = jax.random.split(key, 8)

    def lin(kw, kb, fan_in, fan_out):
        bound = 1.0 / float(fan_in) ** 0.5
        w = jax.random.uniform(kw, (fan_in, fan_out), jnp.float32, -bound, bound)
        b = jax.random.uniform(kb, (1, fan_out), jnp.float32, -bound, bound)
        return w, b

    gen_we, gen_be = lin(ks[0], ks[1], record_num, latent_dim)   # gen.encoder
    gen_wd, gen_bd = lin(ks[2], ks[3], latent_dim, uc)           # gen.decoder
    ed_we, ed_be = lin(ks[4], ks[5], d_in, class_num)            # ed.encoder
    ed_wd, ed_bd = lin(ks[6], ks[7], class_num, d_in)            # ed.decoder
    return dict(gen_we=gen_we, gen_be=gen_be, gen_wd=gen_wd, gen_bd=gen_bd,
                ed_we=ed_we, ed_be=ed_be, ed_wd=ed_wd, ed_bd=ed_bd)


def extractor_forward(params, recordtion_embeds, mask, best_gen_answer, mode, *,
                      user_num, class_num, latent_dim, side_signal=True):
    uc = user_num * class_num
    j = jnp.arange(uc)
    # Column gathers replacing the old one-hot permutation matmuls:
    #   class-major col c*U+u  <-  user-major col u*C+c   (and back).
    to_cm = (j % user_num) * class_num + (j // user_num)
    to_um = (j % class_num) * user_num + (j // class_num)

    if mode == 'decoder':
        B, R = recordtion_embeds.shape
        L = latent_dim
        we, be = params['gen_we'], params['gen_be']
        wd_cm = jnp.take(params['gen_wd'], to_cm, axis=1)  # fold layout perm in
        bd_cm = jnp.take(params['gen_bd'], to_cm, axis=1)
        mask_cm = jnp.take(mask, to_cm, axis=1)

        resident = 4 * (we.size + be.size + wd_cm.size + bd_cm.size)
        stream_row = 4 * (R + uc + (L + uc))       # x + mask + fused output row
        tb = _pick_batch_tile(B, stream_row, resident)
        grid = (pl.cdiv(B, tb),)
        row = lambda f: pl.BlockSpec((tb, f), lambda i: (i, 0))
        kernel = functools.partial(_decoder_kernel, user_num=user_num,
                                   class_num=class_num, latent_dim=L)
        out = pl.pallas_call(
            kernel,
            out_shape=jax.ShapeDtypeStruct((B, L + uc), jnp.float32),
            grid=grid,
            in_specs=[row(R), row(uc),
                      _const_spec(we), _const_spec(be),
                      _const_spec(wd_cm), _const_spec(bd_cm)],
            out_specs=row(L + uc),      # fused, single lane-dense output store
            compiler_params=pltpu.CompilerParams(
                dimension_semantics=("parallel",),
                vmem_limit_bytes=_vmem_limit_bytes(resident, stream_row, tb)),
        )(recordtion_embeds, mask_cm, we, be, wd_cm, bd_cm)
        side_info = out[:, :L]
        gen_answer = jnp.take(out[:, L:], to_um, axis=1)   # back to user-major
        return side_info, gen_answer

    if mode == 'encoder':
        B, d_in = best_gen_answer.shape
        L = latent_dim if side_signal else 0

        # --- per-batch part: y_hat = softmax(x @ We + be) -------------------
        we, be = params['ed_we'], params['ed_be']
        resident = 4 * (we.size + be.size)
        stream_row = 4 * (d_in + class_num)
        tb = _pick_batch_tile(B, stream_row, resident)
        grid = (pl.cdiv(B, tb),)
        row = lambda f: pl.BlockSpec((tb, f), lambda i: (i, 0))
        rec_y_hat = pl.pallas_call(
            _yhat_kernel,
            out_shape=jax.ShapeDtypeStruct((B, class_num), jnp.float32),
            grid=grid,
            in_specs=[row(d_in), _const_spec(we), _const_spec(be)],
            out_specs=row(class_num),
            compiler_params=pltpu.CompilerParams(
                dimension_semantics=("parallel",),
                vmem_limit_bytes=_vmem_limit_bytes(resident, stream_row, tb)),
        )(best_gen_answer, we, be)

        # --- batch-invariant part: one (class_num, d_in) slab, grid-less ----
        if L > 0:
            cols_cm = jnp.concatenate([jnp.arange(L), L + to_cm])
            cols_um = jnp.concatenate([jnp.arange(L), L + to_um])
        else:
            cols_cm, cols_um = to_cm, to_um
        wd_cm = jnp.take(params['ed_wd'], cols_cm, axis=1)
        bd_cm = jnp.take(params['ed_bd'], cols_cm, axis=1)
        xk = functools.partial(_xhat_kernel, user_num=user_num,
                               class_num=class_num, latent_dim=L)
        vmem = pl.BlockSpec(memory_space=pltpu.MemorySpace.VMEM)
        xhat_cm = pl.pallas_call(
            xk,
            out_shape=jax.ShapeDtypeStruct((class_num, d_in), jnp.float32),
            in_specs=[vmem, vmem],
            out_specs=vmem,
        )(wd_cm, bd_cm)
        xhat_rows = jnp.take(xhat_cm, cols_um, axis=1)     # restore user-major
        # Lazy broadcast keeps the (C, B, d_in) module contract; a consumer that
        # can take the (C, d_in) slab should use xhat_rows directly and skip the
        # B-fold redundant HBM writeback.
        rec_x_hat = jnp.broadcast_to(xhat_rows[:, None, :], (class_num, B, d_in))
        return rec_y_hat, rec_x_hat

    raise ValueError(f"unknown mode: {mode}")


# ----------------------------------------------------------------------------
# Pure-JAX reference (mirrors the PyTorch module) for a correctness check
# ----------------------------------------------------------------------------
def _reference(params, x, mask, bga, mode, *, user_num, class_num, latent_dim,
               side_signal=True):
    def paired_softmax(v):
        B = v.shape[0]
        v3 = jax.nn.softmax(v.reshape(B, -1, class_num), axis=2)
        return v3.reshape(B, -1)

    with jax.default_matmul_precision('highest'):
        if mode == 'decoder':
            side = jax.nn.sigmoid(x @ params['gen_we'] + params['gen_be'])
            gen = paired_softmax(side @ params['gen_wd'] + params['gen_bd']) * mask
            return side, gen
        y_hat = jax.nn.softmax(bga @ params['ed_we'] + params['ed_be'], axis=1)
        L = latent_dim if side_signal else 0
        rows = []
        for i in range(class_num):
            xi = params['ed_wd'][i:i + 1] + params['ed_bd']
            if L > 0:
                xi = jnp.concatenate(
                    [jax.nn.sigmoid(xi[:, :L]), paired_softmax(xi[:, L:])], axis=1)
            else:
                xi = paired_softmax(xi)
            rows.append(jnp.broadcast_to(xi, (bga.shape[0], xi.shape[1])))
        return y_hat, jnp.stack(rows, axis=0)


# ----------------------------------------------------------------------------
# Demo
# ----------------------------------------------------------------------------
if __name__ == "__main__":
    batch_size = 2
    record_num = 8
    user_num = 4
    class_num = 2
    latent_dim = 16
    side_signal = True
    uc = user_num * class_num
    d_in = latent_dim + uc

    key = jax.random.PRNGKey(0)
    kp, k1, k2, k3 = jax.random.split(key, 4)
    params = init_params(kp, record_num, user_num, class_num, latent_dim, side_signal)

    recordtion_embeds = jax.random.normal(k1, (batch_size, record_num), jnp.float32)
    mask = (jax.random.uniform(k2, (batch_size, uc)) > 0.3).astype(jnp.float32)
    best_gen_answer = jax.random.normal(k3, (batch_size, d_in), jnp.float32)

    kwargs = dict(user_num=user_num, class_num=class_num,
                  latent_dim=latent_dim, side_signal=side_signal)

    side_info, gen_answer = extractor_forward(
        params, recordtion_embeds, mask, best_gen_answer, 'decoder', **kwargs)
    rec_y_hat, rec_x_hat = extractor_forward(
        params, recordtion_embeds, mask, best_gen_answer, 'encoder', **kwargs)
    jax.block_until_ready((side_info, gen_answer, rec_y_hat, rec_x_hat))

    assert side_info.shape == (batch_size, latent_dim)
    assert gen_answer.shape == (batch_size, uc)
    assert rec_y_hat.shape == (batch_size, class_num)
    assert rec_x_hat.shape == (class_num, batch_size, d_in)

    # Numerical check against the pure-JAX reference.
    ref_side, ref_gen = _reference(params, recordtion_embeds, mask,
                                   best_gen_answer, 'decoder', **kwargs)
    ref_y, ref_x = _reference(params, recordtion_embeds, mask,
                              best_gen_answer, 'encoder', **kwargs)
    assert jnp.allclose(side_info, ref_side, atol=1e-4, rtol=1e-4)
    assert jnp.allclose(gen_answer, ref_gen, atol=1e-4, rtol=1e-4)
    assert jnp.allclose(rec_y_hat, ref_y, atol=1e-4, rtol=1e-4)
    assert jnp.allclose(rec_x_hat, ref_x, atol=1e-4, rtol=1e-4)

    print("KERNEL_OK")
</pallas_src>

<mosaic_0001>
module attributes {stable_mosaic.version = 11 : i64} {
  func.func @_decoder_kernel(%arg0: i32, %arg1: memref<2x8xf32, #tpu.memory_space<vmem>>, %arg2: memref<2x8xf32, #tpu.memory_space<vmem>>, %arg3: memref<8x16xf32, #tpu.memory_space<vmem>>, %arg4: memref<1x16xf32, #tpu.memory_space<vmem>>, %arg5: memref<16x8xf32, #tpu.memory_space<vmem>>, %arg6: memref<1x8xf32, #tpu.memory_space<vmem>>, %arg7: memref<2x24xf32, #tpu.memory_space<vmem>>) attributes {dimension_semantics = [#tpu.dimension_semantics<parallel>], iteration_bounds = array<i64: 1>, scalar_prefetch = 0 : i64, scratch_operands = 0 : i64, tpu.core_type = #tpu.core_type<tc>, window_params = [{transform_indices = @transform_0, window_bounds = array<i64: 2, 8>}, {transform_indices = @transform_1, window_bounds = array<i64: 2, 8>}, {pipeline_mode = #tpu.pipeline_mode<synchronous>, transform_indices = @transform_2, window_bounds = array<i64: 8, 16>}, {pipeline_mode = #tpu.pipeline_mode<synchronous>, transform_indices = @transform_3, window_bounds = array<i64: 1, 16>}, {pipeline_mode = #tpu.pipeline_mode<synchronous>, transform_indices = @transform_4, window_bounds = array<i64: 16, 8>}, {pipeline_mode = #tpu.pipeline_mode<synchronous>, transform_indices = @transform_5, window_bounds = array<i64: 1, 8>}, {transform_indices = @transform_6, window_bounds = array<i64: 2, 24>}]} {
    %c0 = arith.constant 0 : index
    %c0_0 = arith.constant 0 : index
    %0 = vector.load %arg1[%c0, %c0_0] : memref<2x8xf32, #tpu.memory_space<vmem>>, vector<2x8xf32>
    %c0_1 = arith.constant 0 : index
    %c0_2 = arith.constant 0 : index
    %1 = vector.load %arg3[%c0_1, %c0_2] : memref<8x16xf32, #tpu.memory_space<vmem>>, vector<8x16xf32>
    %cst = arith.constant dense<0.000000e+00> : vector<2x16xf32>
    %2 = tpu.matmul %0, %1, %cst {dimension_numbers = #tpu.dot_dimension_numbers<[1], [0], [0], [1], [0, 0, 1, 1], [], []>} : vector<2x8xf32>, vector<8x16xf32>, vector<2x16xf32> -> vector<2x16xf32>
    %c0_3 = arith.constant 0 : index
    %c0_4 = arith.constant 0 : index
    %3 = vector.load %arg4[%c0_3, %c0_4] : memref<1x16xf32, #tpu.memory_space<vmem>>, vector<1x16xf32>
    %4 = vector.broadcast %3 : vector<1x16xf32> to vector<2x16xf32>
    %5 = arith.addf %2, %4 : vector<2x16xf32>
    %6 = arith.negf %5 : vector<2x16xf32>
    %7 = math.exp %6 : vector<2x16xf32>
    %cst_5 = arith.constant 1.000000e+00 : f32
    %8 = vector.broadcast %cst_5 : f32 to vector<2x16xf32>
    %9 = arith.addf %8, %7 : vector<2x16xf32>
    %10 = arith.divf %8, %9 : vector<2x16xf32>
    %c0_6 = arith.constant 0 : index
    %c0_7 = arith.constant 0 : index
    %11 = vector.load %arg7[%c0_6, %c0_7] : memref<2x24xf32, #tpu.memory_space<vmem>>, vector<2x16xf32>
    tpu.vector_store %arg7[%c0_6, %c0_7], %10 {strides = array<i32>} : memref<2x24xf32, #tpu.memory_space<vmem>>, vector<2x16xf32>,
    %c0_8 = arith.constant 0 : index
    %c0_9 = arith.constant 0 : index
    %12 = vector.load %arg5[%c0_8, %c0_9] : memref<16x8xf32, #tpu.memory_space<vmem>>, vector<16x8xf32>
    %cst_10 = arith.constant dense<0.000000e+00> : vector<2x8xf32>
    %13 = tpu.matmul %10, %12, %cst_10 {dimension_numbers = #tpu.dot_dimension_numbers<[1], [0], [0], [1], [0, 0, 1, 1], [], []>} : vector<2x16xf32>, vector<16x8xf32>, vector<2x8xf32> -> vector<2x8xf32>
    %c0_11 = arith.constant 0 : index
    %c0_12 = arith.constant 0 : index
    %14 = vector.load %arg6[%c0_11, %c0_12] : memref<1x8xf32, #tpu.memory_space<vmem>>, vector<1x8xf32>
    %15 = vector.broadcast %14 : vector<1x8xf32> to vector<2x8xf32>
    %16 = arith.addf %13, %15 : vector<2x8xf32>
    %17 = vector.extract_strided_slice %16 {offsets = [0, 0], sizes = [2, 4], strides = [1, 1]} : vector<2x8xf32> to vector<2x4xf32>
    %18 = vector.extract_strided_slice %16 {offsets = [0, 4], sizes = [2, 4], strides = [1, 1]} : vector<2x8xf32> to vector<2x4xf32>
    %19 = arith.maximumf %17, %18 : vector<2x4xf32>
    %20 = vector.extract_strided_slice %16 {offsets = [0, 0], sizes = [2, 4], strides = [1, 1]} : vector<2x8xf32> to vector<2x4xf32>
    %21 = arith.subf %20, %19 : vector<2x4xf32>
    %22 = math.exp %21 : vector<2x4xf32>
    %c0_13 = arith.constant 0 : index
    %c16 = arith.constant 16 : index
    %23 = vector.load %arg7[%c0_13, %c16] : memref<2x24xf32, #tpu.memory_space<vmem>>, vector<2x4xf32>
    tpu.vector_store %arg7[%c0_13, %c16], %22 {strides = array<i32>} : memref<2x24xf32, #tpu.memory_space<vmem>>, vector<2x4xf32>,
    %24 = vector.extract_strided_slice %16 {offsets = [0, 4], sizes = [2, 4], strides = [1, 1]} : vector<2x8xf32> to vector<2x4xf32>
    %25 = arith.subf %24, %19 : vector<2x4xf32>
    %26 = math.exp %25 : vector<2x4xf32>
    %c0_14 = arith.constant 0 : index
    %c20 = arith.constant 20 : index
    %27 = vector.load %arg7[%c0_14, %c20] : memref<2x24xf32, #tpu.memory_space<vmem>>, vector<2x4xf32>
    tpu.vector_store %arg7[%c0_14, %c20], %26 {strides = array<i32>} : memref<2x24xf32, #tpu.memory_space<vmem>>, vector<2x4xf32>,
    %28 = arith.addf %22, %26 : vector<2x4xf32>
    %29 = tpu.reciprocal %28 {approx = true} : vector<2x4xf32> -> vector<2x4xf32>
    %30 = arith.mulf %28, %29 : vector<2x4xf32>
    %cst_15 = arith.constant 2.000000e+00 : f32
    %31 = vector.broadcast %cst_15 : f32 to vector<2x4xf32>
    %32 = arith.subf %31, %30 : vector<2x4xf32>
    %33 = arith.mulf %29, %32 : vector<2x4xf32>
    %c0_16 = arith.constant 0 : index
    %c16_17 = arith.constant 16 : index
    %34 = vector.load %arg7[%c0_16, %c16_17] : memref<2x24xf32, #tpu.memory_space<vmem>>, vector<2x4xf32>
    %35 = arith.mulf %34, %33 : vector<2x4xf32>
    %c0_18 = arith.constant 0 : index
    %c0_19 = arith.constant 0 : index
    %36 = vector.load %arg2[%c0_18, %c0_19] : memref<2x8xf32, #tpu.memory_space<vmem>>, vector<2x4xf32>
    %37 = arith.mulf %35, %36 : vector<2x4xf32>
    %c0_20 = arith.constant 0 : index
    %c16_21 = arith.constant 16 : index
    %38 = vector.load %arg7[%c0_20, %c16_21] : memref<2x24xf32, #tpu.memory_space<vmem>>, vector<2x4xf32>
    tpu.vector_store %arg7[%c0_20, %c16_21], %37 {strides = array<i32>} : memref<2x24xf32, #tpu.memory_space<vmem>>, vector<2x4xf32>,
    %c0_22 = arith.constant 0 : index
    %c20_23 = arith.constant 20 : index
    %39 = vector.load %arg7[%c0_22, %c20_23] : memref<2x24xf32, #tpu.memory_space<vmem>>, vector<2x4xf32>
    %40 = arith.mulf %39, %33 : vector<2x4xf32>
    %c0_24 = arith.constant 0 : index
    %c4 = arith.constant 4 : index
    %41 = vector.load %arg2[%c0_24, %c4] : memref<2x8xf32, #tpu.memory_space<vmem>>, vector<2x4xf32>
    %42 = arith.mulf %40, %41 : vector<2x4xf32>
    %c0_25 = arith.constant 0 : index
    %c20_26 = arith.constant 20 : index
    %43 = vector.load %arg7[%c0_25, %c20_26] : memref<2x24xf32, #tpu.memory_space<vmem>>, vector<2x4xf32>
    tpu.vector_store %arg7[%c0_25, %c20_26], %42 {strides = array<i32>} : memref<2x24xf32, #tpu.memory_space<vmem>>, vector<2x4xf32>,
    return
  }
  func.func @transform_0(%arg0: i32) -> (i32, i32) {
    %c0_i32 = arith.constant 0 : i32
    %c0_i32_0 = arith.constant 0 : i32
    return %arg0, %c0_i32 : i32, i32
  }
  func.func @transform_1(%arg0: i32) -> (i32, i32) {
    %c0_i32 = arith.constant 0 : i32
    %c0_i32_0 = arith.constant 0 : i32
    return %arg0, %c0_i32 : i32, i32
  }
  func.func @transform_2(%arg0: i32) -> (i32, i32) {
    %c0_i32 = arith.constant 0 : i32
    %c0_i32_0 = arith.constant 0 : i32
    %c0_i32_1 = arith.constant 0 : i32
    return %c0_i32, %c0_i32_0 : i32, i32
  }
  func.func @transform_3(%arg0: i32) -> (i32, i32) {
    %c0_i32 = arith.constant 0 : i32
    %c0_i32_0 = arith.constant 0 : i32
    %c0_i32_1 = arith.constant 0 : i32
    return %c0_i32, %c0_i32_0 : i32, i32
  }
  func.func @transform_4(%arg0: i32) -> (i32, i32) {
    %c0_i32 = arith.constant 0 : i32
    %c0_i32_0 = arith.constant 0 : i32
    %c0_i32_1 = arith.constant 0 : i32
    return %c0_i32, %c0_i32_0 : i32, i32
  }
  func.func @transform_5(%arg0: i32) -> (i32, i32) {
    %c0_i32 = arith.constant 0 : i32
    %c0_i32_0 = arith.constant 0 : i32
    %c0_i32_1 = arith.constant 0 : i32
    return %c0_i32, %c0_i32_0 : i32, i32
  }
  func.func @transform_6(%arg0: i32) -> (i32, i32) {
    %c0_i32 = arith.constant 0 : i32
    %c0_i32_0 = arith.constant 0 : i32
    return %arg0, %c0_i32 : i32, i32
  }
}

</mosaic_0001>

<llo_original>
// kernel: tpu_custom_call.1
$region0: #{tpu_custom_call.1}
  #allocation0 [shape = 'u32[]', space=smem, size = 0x4, offset = 0x4, fixed_abs, tag = 'smem constant byte address 0x4 - core index']
  #allocation1 [shape = 'u32[144,128]{1,0:T(1,128)}', space=vmem, size = 0x12000, scoped, tag = 'internal scratch']
  %s0 = inlined_call_operand.vmem [shape: f32[2,8], index: 0, kind: input, shape index: {}]
  %s1 = inlined_call_operand.vmem [shape: f32[2,8], index: 1, kind: input, shape index: {}]
  %s2 = inlined_call_operand.vmem [shape: f32[8,16], index: 2, kind: input, shape index: {}]
  %s3 = inlined_call_operand.vmem [shape: f32[1,16], index: 3, kind: input, shape index: {}]
  %s4 = inlined_call_operand.vmem [shape: f32[16,8], index: 4, kind: input, shape index: {}]
  %s5 = inlined_call_operand.vmem [shape: f32[1,8], index: 5, kind: input, shape index: {}]
  %s6 = inlined_call_operand.hbm [shape: f32[2,24], index: 6, kind: output, shape index: {}]
  %s7 = sld [smem:[#allocation0]]
  $region34: #{tpu_custom_call.1} parent=0
    _
  %s9 = ssub.s32 1, %s7
  %s10 = scalar_select 0, %s9, %s7
  $region1: #{tpu_custom_call.1} parent=0
    #allocation2 [shape = 'u8[1024]{0}', space=vmem, size = 0x400, scoped, tag = 'output window, operand 0, single buffered']
    #allocation3 [shape = 's32[1]{0}', space=sflag, size = 0x4, scoped, tag = 'scoped memory for tpu_custom_call.1']
    %11 = vsyncpa [#allocation3], 0
    // Predicated region
    $region2: #{tpu_custom_call.1} parent=1 // pred_check
      _
    $region3: #{tpu_custom_call.1} parent=1 // pred_check_branch
      %13 = sbr.rel (0) target = $region5
    $region4: #{tpu_custom_call.1} parent=1 // pred_region
      _
    $region5: #{tpu_custom_call.1} parent=1 // pred_fallthru
      _
    // Predicated region
    $region6: #{tpu_custom_call.1} parent=1 // pred_check
      _
    $region7: #{tpu_custom_call.1} parent=1 // pred_check_branch
      %15 = sbr.rel (0) target = $region9
    $region8: #{tpu_custom_call.1} parent=1 // pred_region
      _
    $region9: #{tpu_custom_call.1} parent=1 // pred_fallthru
      _
    // Predicated region
    $region10: #{tpu_custom_call.1} parent=1 // pred_check
      _
    $region11: #{tpu_custom_call.1} parent=1 // pred_check_branch
      %17 = sbr.rel (0) target = $region13
    $region12: #{tpu_custom_call.1} parent=1 // pred_region
      _
    $region13: #{tpu_custom_call.1} parent=1 // pred_fallthru
      _
    // Predicated region
    $region14: #{tpu_custom_call.1} parent=1 // pred_check
      _
    $region15: #{tpu_custom_call.1} parent=1 // pred_check_branch
      %19 = sbr.rel (0) target = $region17
    $region16: #{tpu_custom_call.1} parent=1 // pred_region
      _
    $region17: #{tpu_custom_call.1} parent=1 // pred_fallthru
      _
    // Predicated region
    $region18: #{tpu_custom_call.1} parent=1 // pred_check
      _
    $region19: #{tpu_custom_call.1} parent=1 // pred_check_branch
      %21 = sbr.rel (0) target = $region21
    $region20: #{tpu_custom_call.1} parent=1 // pred_region
      _
    $region21: #{tpu_custom_call.1} parent=1 // pred_fallthru
      _
    // Predicated region
    $region22: #{tpu_custom_call.1} parent=1 // pred_check
      _
    $region23: #{tpu_custom_call.1} parent=1 // pred_check_branch
      %23 = sbr.rel (0) target = $region25
    $region24: #{tpu_custom_call.1} parent=1 // pred_region
      _
    $region25: #{tpu_custom_call.1} parent=1 // pred_fallthru
      _
    %v24 = vld [vmem:[%s0] sm:$0x3]
    %v25 = vld [vmem:[%s2] sm:$0xff]
    %v26 = vld [vmem:[%s3] sm:$0x1]
    %v28 = vlaneseq
    %v29 = vshrl.u32 %v28, 7
    %v30 = vsub.s32 0, %v29
    %v31 = vrot.slane %v26, %v30
    %vm33 = vcmask 64512
    %v35 = vsel %vm33, %v24, 0
    %37 = vmatprep.subr.mxu0 0.0
    %38 = vmatpush1.msra.mxu0 %v25
    %39 = vmatprep.subr.mxu0 0.0
    %40 = vmatpush1.msra.mxu0 0.0
    %41 = vmatprep.subr.mxu0 0.0
    %42 = vmatpush1.msra.mxu0 0.0
    %43 = vmatprep.subr.mxu0 0.0
    %44 = vmatpush1.msra.mxu0 0.0
    %45 = vmatprep.subr.mxu0 0.0
    %46 = vmatpush1.msra.mxu0 0.0
    %47 = vmatprep.subr.mxu0 0.0
    %48 = vmatpush1.msra.mxu0 0.0
    %49 = vmatprep.subr.mxu0 0.0
    %50 = vmatpush1.msra.mxu0 0.0
    %51 = vmatprep.subr.mxu0 0.0
    %52 = vmatpush1.msra.mxu0 0.0
    %53 = vmatprep.subr.mxu0 0.0
    %54 = vmatpush1.msra.mxu0 0.0
    %55 = vmatprep.subr.mxu0 0.0
    %56 = vmatpush1.msra.mxu0 0.0
    %57 = vmatprep.subr.mxu0 0.0
    %58 = vmatpush1.msra.mxu0 0.0
    %59 = vmatprep.subr.mxu0 0.0
    %60 = vmatpush1.msra.mxu0 0.0
    %61 = vmatprep.subr.mxu0 0.0
    %62 = vmatpush1.msra.mxu0 0.0
    %63 = vmatprep.subr.mxu0 0.0
    %64 = vmatpush1.msra.mxu0 0.0
    %65 = vmatprep.subr.mxu0 0.0
    %66 = vmatpush1.msra.mxu0 0.0
    %67 = vmatprep.subr.mxu0 0.0
    %68 = vmatpush1.msra.mxu0 0.0
    %69 = vmatprep.subr.mxu0 0.0
    %70 = vmatpush1.msra.mxu0 0.0
    %71 = vmatprep.subr.mxu0 0.0
    %72 = vmatpush1.msra.mxu0 0.0
    %73 = vmatprep.subr.mxu0 0.0
    %74 = vmatpush1.msra.mxu0 0.0
    %75 = vmatprep.subr.mxu0 0.0
    %76 = vmatpush1.msra.mxu0 0.0
    %77 = vmatprep.subr.mxu0 0.0
    %78 = vmatpush1.msra.mxu0 0.0
    %79 = vmatprep.subr.mxu0 0.0
    %80 = vmatpush1.msra.mxu0 0.0
    %81 = vmatprep.subr.mxu0 0.0
    %82 = vmatpush1.msra.mxu0 0.0
    %83 = vmatprep.subr.mxu0 0.0
    %84 = vmatpush1.msra.mxu0 0.0
    %85 = vmatprep.subr.mxu0 0.0
    %86 = vmatpush1.msra.mxu0 0.0
    %87 = vmatprep.subr.mxu0 0.0
    %88 = vmatpush1.msra.mxu0 0.0
    %89 = vmatprep.subr.mxu0 0.0
    %90 = vmatpush1.msra.mxu0 0.0
    %91 = vmatprep.subr.mxu0 0.0
    %92 = vmatpush1.msra.mxu0 0.0
    %93 = vmatprep.subr.mxu0 0.0
    %94 = vmatpush1.msra.mxu0 0.0
    %95 = vmatprep.subr.mxu0 0.0
    %96 = vmatpush1.msra.mxu0 0.0
    %97 = vmatprep.subr.mxu0 0.0
    %98 = vmatpush1.msra.mxu0 0.0
    %99 = vmatprep.subr.mxu0 0.0
    %100 = vmatpush1.msra.mxu0 0.0
    %101 = vmatprep.mubr.f32.mxu0 0.0
    %102 = vmatmul.mubr.f32.gmra.mrb[0].mxu0 %v35
    %v103 = vpop.f32.mrb[0].mxu0
    %v104 = vadd.f32 %v31, %v103
    %v105 = vpop.f32.mrb[0].mxu0
    %106 = vdwg.mxu0
    %v107 = vxor.u32 %v104, 2147483648
    %v108 = vmul.f32 %v107, 1.442695
    %v109 = vpow.pop %v108
    %v110 = vadd.f32 %v109, 1.0
    %v111 = vrcp.pop %v110
    %v112 = vmul.f32 1.0, %v111
    %vm113 = vcmask 123904
    %114 = vst.msk [vmem:[#allocation2] sm:$0x3] %vm113, %v112
    %v115 = vld [vmem:[%s4] sm:$0xff]
    %v116 = vld [vmem:[%s4 + $0x8] sm:$0xff]
    %v117 = vld [vmem:[%s5] sm:$0x1]
    %v119 = vlaneseq
    %v120 = vshrl.u32 %v119, 7
    %v121 = vsub.s32 0, %v120
    %v122 = vrot.slane %v117, %v121
    %vm124 = vcmask 130048
    %v126 = vsel %vm124, %v112, 0
    %128 = vmatprep.subr.mxu0 0.0
    %129 = vmatpush1.msra.mxu0 %v115
    %130 = vmatprep.subr.mxu0 0.0
    %131 = vmatpush1.msra.mxu0 %v116
    %132 = vmatprep.subr.mxu0 0.0
    %133 = vmatpush1.msra.mxu0 0.0
    %134 = vmatprep.subr.mxu0 0.0
    %135 = vmatpush1.msra.mxu0 0.0
    %136 = vmatprep.subr.mxu0 0.0
    %137 = vmatpush1.msra.mxu0 0.0
    %138 = vmatprep.subr.mxu0 0.0
    %139 = vmatpush1.msra.mxu0 0.0
    %140 = vmatprep.subr.mxu0 0.0
    %141 = vmatpush1.msra.mxu0 0.0
    %142 = vmatprep.subr.mxu0 0.0
    %143 = vmatpush1.msra.mxu0 0.0
    %144 = vmatprep.subr.mxu0 0.0
    %145 = vmatpush1.msra.mxu0 0.0
    %146 = vmatprep.subr.mxu0 0.0
    %147 = vmatpush1.msra.mxu0 0.0
    %148 = vmatprep.subr.mxu0 0.0
    %149 = vmatpush1.msra.mxu0 0.0
    %150 = vmatprep.subr.mxu0 0.0
    %151 = vmatpush1.msra.mxu0 0.0
    %152 = vmatprep.subr.mxu0 0.0
    %153 = vmatpush1.msra.mxu0 0.0
    %154 = vmatprep.subr.mxu0 0.0
    %155 = vmatpush1.msra.mxu0 0.0
    %156 = vmatprep.subr.mxu0 0.0
    %157 = vmatpush1.msra.mxu0 0.0
    %158 = vmatprep.subr.mxu0 0.0
    %159 = vmatpush1.msra.mxu0 0.0
    %160 = vmatprep.subr.mxu0 0.0
    %161 = vmatpush1.msra.mxu0 0.0
    %162 = vmatprep.subr.mxu0 0.0
    %163 = vmatpush1.msra.mxu0 0.0
    %164 = vmatprep.subr.mxu0 0.0
    %165 = vmatpush1.msra.mxu0 0.0
    %166 = vmatprep.subr.mxu0 0.0
    %167 = vmatpush1.msra.mxu0 0.0
    %168 = vmatprep.subr.mxu0 0.0
    %169 = vmatpush1.msra.mxu0 0.0
    %170 = vmatprep.subr.mxu0 0.0
    %171 = vmatpush1.msra.mxu0 0.0
    %172 = vmatprep.subr.mxu0 0.0
    %173 = vmatpush1.msra.mxu0 0.0
    %174 = vmatprep.subr.mxu0 0.0
    %175 = vmatpush1.msra.mxu0 0.0
    %176 = vmatprep.subr.mxu0 0.0
    %177 = vmatpush1.msra.mxu0 0.0
    %178 = vmatprep.subr.mxu0 0.0
    %179 = vmatpush1.msra.mxu0 0.0
    %180 = vmatprep.subr.mxu0 0.0
    %181 = vmatpush1.msra.mxu0 0.0
    %182 = vmatprep.subr.mxu0 0.0
    %183 = vmatpush1.msra.mxu0 0.0
    %184 = vmatprep.subr.mxu0 0.0
    %185 = vmatpush1.msra.mxu0 0.0
    %186 = vmatprep.subr.mxu0 0.0
    %187 = vmatpush1.msra.mxu0 0.0
    %188 = vmatprep.subr.mxu0 0.0
    %189 = vmatpush1.msra.mxu0 0.0
    %190 = vmatprep.subr.mxu0 0.0
    %191 = vmatpush1.msra.mxu0 0.0
    %192 = vmatprep.mubr.f32.mxu0 0.0
    %193 = vmatmul.mubr.f32.gmra.mrb[0].mxu0 %v126
    %v194 = vpop.f32.mrb[0].mxu0
    %v195 = vadd.f32 %v122, %v194
    %v196 = vpop.f32.mrb[0].mxu0
    %197 = vdwg.mxu0
    %199 = vrot.lane.b32.xlu0 %v195, 124
    %v200 = vpop.permute.xlu0 %199
    %v202 = vmax.f32 %v195, %v200
    %v203 = vsub.f32 %v195, %v202
    %v204 = vmul.f32 %v203, 1.442695
    %v205 = vpow.pop %v204
    %207 = vrot.lane.b32.xlu0 %v205, 16
    %v208 = vpop.permute.xlu0 %207
    %vm210 = vcmask 156800
    %211 = vst.msk [vmem:[#allocation2] sm:$0x3] %vm210, %v208
    %213 = vrot.lane.b32.xlu0 %v202, 4
    %v214 = vpop.permute.xlu0 %213
    %v216 = vsub.f32 %v195, %v214
    %v217 = vmul.f32 %v216, 1.442695
    %v218 = vpow.pop %v217
    %220 = vrot.lane.b32.xlu0 %v218, 16
    %v221 = vpop.permute.xlu0 %220
    %vm223 = vcmask 189600
    %224 = vst.msk [vmem:[#allocation2] sm:$0x3] %vm223, %v221
    %225 = vrot.lane.b32.xlu0 %v218, 124
    %v226 = vpop.permute.xlu0 %225
    %v228 = vadd.f32 %v205, %v226
    %v229 = vrcp.pop %v228
    %v230 = vmul.f32 %v228, %v229
    %v231 = vsub.f32 2.0, %v230
    %v232 = vmul.f32 %v229, %v231
    %v233 = vld [vmem:[#allocation2] sm:$0x3]
    %235 = vrot.lane.b32.xlu0 %v232, 16
    %v236 = vpop.permute.xlu0 %235
    %v238 = vmul.f32 %v233, %v236
    %v239 = vld [vmem:[%s1] sm:$0x3]
    %241 = vrot.lane.b32.xlu0 %v239, 16
    %v242 = vpop.permute.xlu0 %241
    %v244 = vmul.f32 %v238, %v242
    %245 = vst.msk [vmem:[#allocation2] sm:$0x3] %vm210, %v244
    %v246 = vld [vmem:[#allocation2] sm:$0x3]
    %247 = vrot.lane.b32.xlu0 %v232, 20
    %v248 = vpop.permute.xlu0 %247
    %v250 = vmul.f32 %v246, %v248
    %v251 = vld [vmem:[%s1] sm:$0x3]
    %253 = vrot.lane.b32.xlu0 %v251, 16
    %v254 = vpop.permute.xlu0 %253
    %v256 = vmul.f32 %v250, %v254
    %257 = vst.msk [vmem:[#allocation2] sm:$0x3] %vm223, %v256
    // Predicated region
    $region26: #{tpu_custom_call.1} parent=1 // pred_check
      _
    $region27: #{tpu_custom_call.1} parent=1 // pred_check_branch
      %259 = sbr.rel (0) target = $region29
    $region28: #{tpu_custom_call.1} parent=1 // pred_region
      %s261 = ssub.s32 32, 32
      %262 = vsyncadd [#allocation3], %s261
      %s264 = sshll.u32 [#allocation2], 4
      %s265 = int_to_ptr.vmem [resolvable:$true] %s264
      %267 = dma.vmem_to_hbm [thread:$0]  %s265, 32, %s6, [#allocation3]
    $region29: #{tpu_custom_call.1} parent=1 // pred_fallthru
      _
    // Predicated region
    $region30: #{tpu_custom_call.1} parent=1 // pred_check
      _
    $region31: #{tpu_custom_call.1} parent=1 // pred_check_branch
      %269 = sbr.rel (0) target = $region33
    $region32: #{tpu_custom_call.1} parent=1 // pred_region
      %270 = dma.done [#allocation3], 32
    $region33: #{tpu_custom_call.1} parent=1 // pred_fallthru
      _
    %271 = vsyncpa [#allocation3], 1

</llo_original>
